<compile_context>
chip_gen: v7x
topology: tpu7x:2x2x1
jax: 0.10.0
libtpu: 0.0.40
codegen_flags: <defaults>
</compile_context>

<pallas_src>
import functools

import jax
import jax.numpy as jnp
from jax.experimental import pallas as pl
from jax.experimental.pallas import tpu as pltpu

_SUBLANE = 8  # f32 sublane alignment for the (second-to-last) batch-tile dim


def _round_up(n: int, m: int) -> int:
    return ((n + m - 1) // m) * m


def policy_kernel(x_ref, w1_ref, b1_ref, w2_ref, b2_ref, o_ref, *, precision):
    # Layer 1: x @ W1 + b1 (MXU, f32 accumulation), then ReLU (VPU).
    h = jnp.dot(x_ref[...], w1_ref[...],
                preferred_element_type=jnp.float32, precision=precision)
    h = jnp.maximum(h + b1_ref[...], 0.0)
    # Dropout(p=0.8) -> identity in eval mode.
    # Layer 2: h @ W2 + b2 (MXU, f32 accumulation). Output block's last dim is
    # the full action_dim; the narrow masked store is trivial vs HBM bytes saved.
    out = jnp.dot(h.astype(w2_ref.dtype), w2_ref[...],
                  preferred_element_type=jnp.float32, precision=precision)
    o_ref[...] = (out + b2_ref[...]).astype(o_ref.dtype)


@functools.partial(
    jax.jit, static_argnames=("block_b", "compute_dtype", "core_parallel"))
def policy_forward(x, w1, b1, w2, b2, block_b: int = 4096,
                   compute_dtype=jnp.float32, core_parallel: bool = False):
    """x: (B, obs_dim) f32 -> logits: (B, action_dim) f32.

    Batch many observations into one call; x and the logits stream through
    VMEM in fat batch tiles while the (tiny) weights stay resident.
    """
    B, obs_dim = x.shape
    hidden_dim = w1.shape[1]
    action_dim = w2.shape[1]

    # Optional reduced-precision input path (f32 accumulation is kept).
    if compute_dtype != jnp.float32:
        x = x.astype(compute_dtype)
        w1 = w1.astype(compute_dtype)
        w2 = w2.astype(compute_dtype)
        precision = jax.lax.Precision.DEFAULT     # native bf16 MXU pass
    else:
        precision = jax.lax.Precision.HIGHEST     # true float32 semantics

    # Batch tile: multiple of 8, capped at block_b. No padding of x: the grid
    # uses cdiv and Pallas masks the edge block's out-of-range rows.
    tb = _round_up(min(block_b, _round_up(B, _SUBLANE)), _SUBLANE)
    grid = (pl.cdiv(B, tb),)

    dim_sem = (pltpu.CORE_PARALLEL,) if core_parallel else ("parallel",)
    kernel = functools.partial(policy_kernel, precision=precision)

    return pl.pallas_call(
        kernel,
        out_shape=jax.ShapeDtypeStruct((B, action_dim), jnp.float32),
        grid=grid,
        in_specs=[
            # x: batch-tiled, double-buffered / streamed across grid steps.
            # Last block dim == full array dim, so no lane padding is needed.
            pl.BlockSpec((tb, obs_dim), lambda i: (i, 0)),
            # Weights / biases: same block every step -> fetched from HBM once
            # and kept resident in VMEM for the whole grid.
            pl.BlockSpec((obs_dim, hidden_dim), lambda i: (0, 0)),
            pl.BlockSpec((1, hidden_dim), lambda i: (0, 0)),
            pl.BlockSpec((hidden_dim, action_dim), lambda i: (0, 0)),
            pl.BlockSpec((1, action_dim), lambda i: (0, 0)),
        ],
        out_specs=pl.BlockSpec((tb, action_dim), lambda i: (i, 0)),
        compiler_params=pltpu.CompilerParams(
            dimension_semantics=dim_sem,
            # Explicit budget valid on every generation (v7x physical VMEM is
            # 64 MiB); double-buffered tiles + resident weights are << this.
            vmem_limit_bytes=32 << 20,
        ),
    )(x, w1, b1, w2, b2)


def init_policy_params(key, obs_dim, hidden_dim, action_dim):
    """Deterministic init mimicking nn.Linear's U(-1/sqrt(fan_in), +1/sqrt(fan_in)).

    Weights stored pre-transposed as (in_features, out_features); biases kept
    2-D (1, out) for clean lane broadcasting in-kernel.
    """
    k1, k2, k3, k4 = jax.random.split(key, 4)
    bound1 = 1.0 / jnp.sqrt(obs_dim)
    bound2 = 1.0 / jnp.sqrt(hidden_dim)
    w1 = jax.random.uniform(k1, (obs_dim, hidden_dim), jnp.float32, -bound1, bound1)
    b1 = jax.random.uniform(k2, (1, hidden_dim), jnp.float32, -bound1, bound1)
    w2 = jax.random.uniform(k3, (hidden_dim, action_dim), jnp.float32, -bound2, bound2)
    b2 = jax.random.uniform(k4, (1, action_dim), jnp.float32, -bound2, bound2)
    return w1, b1, w2, b2


if __name__ == "__main__":
    obs_dim, hidden_dim, action_dim = 16, 32, 8

    key = jax.random.PRNGKey(0)
    kx, kp, kx2 = jax.random.split(key, 3)
    w1, b1, w2, b2 = init_policy_params(kp, obs_dim, hidden_dim, action_dim)

    def reference(x):
        hp = jax.lax.Precision.HIGHEST
        h = jnp.maximum(jnp.dot(x, w1, precision=hp) + b1, 0.0)
        return jnp.dot(h, w2, precision=hp) + b2

    # 1) Small-shape check (matches the module's typical single-env forward).
    B_small = 2
    x_small = jax.random.normal(kx, (B_small, obs_dim), dtype=jnp.float32)
    logits_small = jax.block_until_ready(policy_forward(x_small, w1, b1, w2, b2))
    assert logits_small.shape == (B_small, action_dim)
    assert jnp.allclose(logits_small, reference(x_small), atol=1e-5, rtol=1e-5)

    # 2) Large-batch check: multi-step grid, resident weights, and a
    #    non-divisible edge block handled by Pallas masking (no wrapper pad).
    B_large = 1000
    x_large = jax.random.normal(kx2, (B_large, obs_dim), dtype=jnp.float32)
    logits_large = jax.block_until_ready(
        policy_forward(x_large, w1, b1, w2, b2, block_b=256))
    assert logits_large.shape == (B_large, action_dim)
    assert jnp.allclose(logits_large, reference(x_large), atol=1e-5, rtol=1e-5)

    # 3) Optional bf16-input path (mem-bound win on v5e); loose tolerance.
    logits_bf16 = jax.block_until_ready(
        policy_forward(x_large, w1, b1, w2, b2, block_b=256,
                       compute_dtype=jnp.bfloat16))
    assert logits_bf16.shape == (B_large, action_dim)
    assert jnp.allclose(logits_bf16, reference(x_large), atol=0.1, rtol=0.1)

    print("KERNEL_OK")
</pallas_src>

<mosaic_0001>
module attributes {stable_mosaic.version = 11 : i64} {
  func.func @policy_kernel(%arg0: i32, %arg1: memref<8x16xf32, #tpu.memory_space<vmem>>, %arg2: memref<16x32xf32, #tpu.memory_space<vmem>>, %arg3: memref<1x32xf32, #tpu.memory_space<vmem>>, %arg4: memref<32x8xf32, #tpu.memory_space<vmem>>, %arg5: memref<1x8xf32, #tpu.memory_space<vmem>>, %arg6: memref<8x8xf32, #tpu.memory_space<vmem>>) attributes {dimension_semantics = [#tpu.dimension_semantics<parallel>], iteration_bounds = array<i64: 1>, scalar_prefetch = 0 : i64, scratch_operands = 0 : i64, tpu.core_type = #tpu.core_type<tc>, window_params = [{transform_indices = @transform_0, window_bounds = array<i64: 8, 16>}, {pipeline_mode = #tpu.pipeline_mode<synchronous>, transform_indices = @transform_1, window_bounds = array<i64: 16, 32>}, {pipeline_mode = #tpu.pipeline_mode<synchronous>, transform_indices = @transform_2, window_bounds = array<i64: 1, 32>}, {pipeline_mode = #tpu.pipeline_mode<synchronous>, transform_indices = @transform_3, window_bounds = array<i64: 32, 8>}, {pipeline_mode = #tpu.pipeline_mode<synchronous>, transform_indices = @transform_4, window_bounds = array<i64: 1, 8>}, {transform_indices = @transform_5, window_bounds = array<i64: 8, 8>}]} {
    %c0 = arith.constant 0 : index
    %c0_0 = arith.constant 0 : index
    %0 = vector.load %arg1[%c0, %c0_0] : memref<8x16xf32, #tpu.memory_space<vmem>>, vector<8x16xf32>
    %c0_1 = arith.constant 0 : index
    %c0_2 = arith.constant 0 : index
    %1 = vector.load %arg2[%c0_1, %c0_2] : memref<16x32xf32, #tpu.memory_space<vmem>>, vector<16x32xf32>
    %cst = arith.constant dense<0.000000e+00> : vector<8x32xf32>
    %2 = tpu.matmul %0, %1, %cst {dimension_numbers = #tpu.dot_dimension_numbers<[1], [0], [0], [1], [0, 0, 1, 1], [], []>, precision = #tpu.contract_precision<fp32>} : vector<8x16xf32>, vector<16x32xf32>, vector<8x32xf32> -> vector<8x32xf32>
    %c0_3 = arith.constant 0 : index
    %c0_4 = arith.constant 0 : index
    %3 = vector.load %arg3[%c0_3, %c0_4] : memref<1x32xf32, #tpu.memory_space<vmem>>, vector<1x32xf32>
    %4 = vector.broadcast %3 : vector<1x32xf32> to vector<8x32xf32>
    %5 = arith.addf %2, %4 : vector<8x32xf32>
    %cst_5 = arith.constant 0.000000e+00 : f32
    %6 = vector.broadcast %cst_5 : f32 to vector<8x32xf32>
    %7 = arith.maximumf %5, %6 : vector<8x32xf32>
    %c0_6 = arith.constant 0 : index
    %c0_7 = arith.constant 0 : index
    %8 = vector.load %arg4[%c0_6, %c0_7] : memref<32x8xf32, #tpu.memory_space<vmem>>, vector<32x8xf32>
    %cst_8 = arith.constant dense<0.000000e+00> : vector<8x8xf32>
    %9 = tpu.matmul %7, %8, %cst_8 {dimension_numbers = #tpu.dot_dimension_numbers<[1], [0], [0], [1], [0, 0, 1, 1], [], []>, precision = #tpu.contract_precision<fp32>} : vector<8x32xf32>, vector<32x8xf32>, vector<8x8xf32> -> vector<8x8xf32>
    %c0_9 = arith.constant 0 : index
    %c0_10 = arith.constant 0 : index
    %10 = vector.load %arg5[%c0_9, %c0_10] : memref<1x8xf32, #tpu.memory_space<vmem>>, vector<1x8xf32>
    %11 = vector.broadcast %10 : vector<1x8xf32> to vector<8x8xf32>
    %12 = arith.addf %9, %11 : vector<8x8xf32>
    %c0_11 = arith.constant 0 : index
    %c0_12 = arith.constant 0 : index
    %13 = vector.load %arg6[%c0_11, %c0_12] : memref<8x8xf32, #tpu.memory_space<vmem>>, vector<8x8xf32>
    tpu.vector_store %arg6[%c0_11, %c0_12], %12 {strides = array<i32>} : memref<8x8xf32, #tpu.memory_space<vmem>>, vector<8x8xf32>,
    return
  }
  func.func @transform_0(%arg0: i32) -> (i32, i32) {
    %c0_i32 = arith.constant 0 : i32
    %c0_i32_0 = arith.constant 0 : i32
    return %arg0, %c0_i32 : i32, i32
  }
  func.func @transform_1(%arg0: i32) -> (i32, i32) {
    %c0_i32 = arith.constant 0 : i32
    %c0_i32_0 = arith.constant 0 : i32
    %c0_i32_1 = arith.constant 0 : i32
    return %c0_i32, %c0_i32_0 : i32, i32
  }
  func.func @transform_2(%arg0: i32) -> (i32, i32) {
    %c0_i32 = arith.constant 0 : i32
    %c0_i32_0 = arith.constant 0 : i32
    %c0_i32_1 = arith.constant 0 : i32
    return %c0_i32, %c0_i32_0 : i32, i32
  }
  func.func @transform_3(%arg0: i32) -> (i32, i32) {
    %c0_i32 = arith.constant 0 : i32
    %c0_i32_0 = arith.constant 0 : i32
    %c0_i32_1 = arith.constant 0 : i32
    return %c0_i32, %c0_i32_0 : i32, i32
  }
  func.func @transform_4(%arg0: i32) -> (i32, i32) {
    %c0_i32 = arith.constant 0 : i32
    %c0_i32_0 = arith.constant 0 : i32
    %c0_i32_1 = arith.constant 0 : i32
    return %c0_i32, %c0_i32_0 : i32, i32
  }
  func.func @transform_5(%arg0: i32) -> (i32, i32) {
    %c0_i32 = arith.constant 0 : i32
    %c0_i32_0 = arith.constant 0 : i32
    return %arg0, %c0_i32 : i32, i32
  }
}

</mosaic_0001>

<llo_original>
// kernel: policy_forward.1
$region0: #{policy_forward.1}
  #allocation0 [shape = 'u32[]', space=smem, size = 0x4, offset = 0x4, fixed_abs, tag = 'smem constant byte address 0x4 - core index']
  #allocation1 [shape = 'u32[144,128]{1,0:T(1,128)}', space=vmem, size = 0x12000, scoped, tag = 'internal scratch']
  %s0 = inlined_call_operand.vmem [shape: f32[2,16], index: 0, kind: input, shape index: {}]
  %s1 = inlined_call_operand.vmem [shape: f32[16,32], index: 1, kind: input, shape index: {}]
  %s2 = inlined_call_operand.vmem [shape: f32[1,32], index: 2, kind: input, shape index: {}]
  %s3 = inlined_call_operand.vmem [shape: f32[32,8], index: 3, kind: input, shape index: {}]
  %s4 = inlined_call_operand.vmem [shape: f32[1,8], index: 4, kind: input, shape index: {}]
  %s5 = inlined_call_operand.hbm [shape: f32[2,8], index: 5, kind: output, shape index: {}]
  %s6 = sld [smem:[#allocation0]]
  $region30: #{policy_forward.1} parent=0
    _
  %s8 = ssub.s32 1, %s6
  %s9 = scalar_select 0, %s8, %s6
  $region1: #{policy_forward.1} parent=0
    #allocation2 [shape = 'u8[4096]{0}', space=vmem, size = 0x1000, scoped, tag = 'output window, operand 0, single buffered']
    #allocation3 [shape = 's32[1]{0}', space=sflag, size = 0x4, scoped, tag = 'scoped memory for policy_forward.1']
    %10 = vsyncpa [#allocation3], 0
    // Predicated region
    $region2: #{policy_forward.1} parent=1 // pred_check
      _
    $region3: #{policy_forward.1} parent=1 // pred_check_branch
      %12 = sbr.rel (0) target = $region5
    $region4: #{policy_forward.1} parent=1 // pred_region
      _
    $region5: #{policy_forward.1} parent=1 // pred_fallthru
      _
    // Predicated region
    $region6: #{policy_forward.1} parent=1 // pred_check
      _
    $region7: #{policy_forward.1} parent=1 // pred_check_branch
      %14 = sbr.rel (0) target = $region9
    $region8: #{policy_forward.1} parent=1 // pred_region
      _
    $region9: #{policy_forward.1} parent=1 // pred_fallthru
      _
    // Predicated region
    $region10: #{policy_forward.1} parent=1 // pred_check
      _
    $region11: #{policy_forward.1} parent=1 // pred_check_branch
      %16 = sbr.rel (0) target = $region13
    $region12: #{policy_forward.1} parent=1 // pred_region
      _
    $region13: #{policy_forward.1} parent=1 // pred_fallthru
      _
    // Predicated region
    $region14: #{policy_forward.1} parent=1 // pred_check
      _
    $region15: #{policy_forward.1} parent=1 // pred_check_branch
      %18 = sbr.rel (0) target = $region17
    $region16: #{policy_forward.1} parent=1 // pred_region
      _
    $region17: #{policy_forward.1} parent=1 // pred_fallthru
      _
    // Predicated region
    $region18: #{policy_forward.1} parent=1 // pred_check
      _
    $region19: #{policy_forward.1} parent=1 // pred_check_branch
      %20 = sbr.rel (0) target = $region21
    $region20: #{policy_forward.1} parent=1 // pred_region
      _
    $region21: #{policy_forward.1} parent=1 // pred_fallthru
      _
    %v21 = vld [vmem:[%s0] sm:$0xff]
    %v22 = vld [vmem:[%s1] sm:$0xff]
    %v23 = vld [vmem:[%s1 + $0x8] sm:$0xff]
    %v24 = vld [vmem:[%s2] sm:$0x1]
    %v26 = vlaneseq
    %v27 = vshrl.u32 %v26, 7
    %v28 = vsub.s32 0, %v27
    %v29 = vrot.slane %v24, %v28
    %vm31 = vcmask 130048
    %v33 = vsel %vm31, %v21, 0
    %35 = vmatprep.subr.mxu0 0.0
    %v36 = vand.u32 %v22, 4294901760
    %37 = vmatpush1.msra.mxu0 %v36
    %38 = vmatprep.subr.mxu0 0.0
    %v39 = vand.u32 %v23, 4294901760
    %40 = vmatpush1.msra.mxu0 %v39
    %41 = vmatprep.subr.mxu0 0.0
    %42 = vmatpush1.msra.mxu0 0.0
    %43 = vmatprep.subr.mxu0 0.0
    %44 = vmatpush1.msra.mxu0 0.0
    %45 = vmatprep.subr.mxu0 0.0
    %46 = vmatpush1.msra.mxu0 0.0
    %47 = vmatprep.subr.mxu0 0.0
    %48 = vmatpush1.msra.mxu0 0.0
    %49 = vmatprep.subr.mxu0 0.0
    %50 = vmatpush1.msra.mxu0 0.0
    %51 = vmatprep.subr.mxu0 0.0
    %52 = vmatpush1.msra.mxu0 0.0
    %53 = vmatprep.subr.mxu0 0.0
    %54 = vmatpush1.msra.mxu0 0.0
    %55 = vmatprep.subr.mxu0 0.0
    %56 = vmatpush1.msra.mxu0 0.0
    %57 = vmatprep.subr.mxu0 0.0
    %58 = vmatpush1.msra.mxu0 0.0
    %59 = vmatprep.subr.mxu0 0.0
    %60 = vmatpush1.msra.mxu0 0.0
    %61 = vmatprep.subr.mxu0 0.0
    %62 = vmatpush1.msra.mxu0 0.0
    %63 = vmatprep.subr.mxu0 0.0
    %64 = vmatpush1.msra.mxu0 0.0
    %65 = vmatprep.subr.mxu0 0.0
    %66 = vmatpush1.msra.mxu0 0.0
    %67 = vmatprep.subr.mxu0 0.0
    %68 = vmatpush1.msra.mxu0 0.0
    %69 = vmatprep.subr.mxu0 0.0
    %70 = vmatpush1.msra.mxu0 0.0
    %71 = vmatprep.subr.mxu0 0.0
    %72 = vmatpush1.msra.mxu0 0.0
    %73 = vmatprep.subr.mxu0 0.0
    %74 = vmatpush1.msra.mxu0 0.0
    %75 = vmatprep.subr.mxu0 0.0
    %76 = vmatpush1.msra.mxu0 0.0
    %77 = vmatprep.subr.mxu0 0.0
    %78 = vmatpush1.msra.mxu0 0.0
    %79 = vmatprep.subr.mxu0 0.0
    %80 = vmatpush1.msra.mxu0 0.0
    %81 = vmatprep.subr.mxu0 0.0
    %82 = vmatpush1.msra.mxu0 0.0
    %83 = vmatprep.subr.mxu0 0.0
    %84 = vmatpush1.msra.mxu0 0.0
    %85 = vmatprep.subr.mxu0 0.0
    %86 = vmatpush1.msra.mxu0 0.0
    %87 = vmatprep.subr.mxu0 0.0
    %88 = vmatpush1.msra.mxu0 0.0
    %89 = vmatprep.subr.mxu0 0.0
    %90 = vmatpush1.msra.mxu0 0.0
    %91 = vmatprep.subr.mxu0 0.0
    %92 = vmatpush1.msra.mxu0 0.0
    %93 = vmatprep.subr.mxu0 0.0
    %94 = vmatpush1.msra.mxu0 0.0
    %95 = vmatprep.subr.mxu0 0.0
    %96 = vmatpush1.msra.mxu0 0.0
    %97 = vmatprep.subr.mxu0 0.0
    %98 = vmatpush1.msra.mxu0 0.0
    %99 = vmatprep.subr.mxu0 0.0
    %100 = vmatpush1.msra.mxu0 0.0
    %101 = vmatprep.mubr.f32.mxu0 0.0
    %v102 = vand.u32 %v33, 4294901760
    %v103 = vsub.f32 %v33, %v102
    %v104 = vand.u32 %v103, 4294901760
    %v105 = vsub.f32 %v103, %v104
    %v106 = vand.u32 %v105, 4294901760
    %107 = vmatmul.mubr.f32.gmra.mrb[0].mxu0 %v106
    %v108 = vpop.f32.mrb[0].mxu0
    %v109 = vadd.f32 %v29, %v108
    %v110 = vpop.f32.mrb[0].mxu0
    %111 = vdwg.mxu0
    %112 = vmatprep.subr.mxu0 0.0
    %v113 = vand.u32 %v22, 4294901760
    %v114 = vsub.f32 %v22, %v113
    %v115 = vand.u32 %v114, 4294901760
    %v116 = vsub.f32 %v114, %v115
    %v117 = vand.u32 %v116, 4294901760
    %118 = vmatpush1.msra.mxu0 %v117
    %119 = vmatprep.subr.mxu0 0.0
    %v120 = vand.u32 %v23, 4294901760
    %v121 = vsub.f32 %v23, %v120
    %v122 = vand.u32 %v121, 4294901760
    %v123 = vsub.f32 %v121, %v122
    %v124 = vand.u32 %v123, 4294901760
    %125 = vmatpush1.msra.mxu0 %v124
    %126 = vmatprep.subr.mxu0 0.0
    %127 = vmatpush1.msra.mxu0 0.0
    %128 = vmatprep.subr.mxu0 0.0
    %129 = vmatpush1.msra.mxu0 0.0
    %130 = vmatprep.subr.mxu0 0.0
    %131 = vmatpush1.msra.mxu0 0.0
    %132 = vmatprep.subr.mxu0 0.0
    %133 = vmatpush1.msra.mxu0 0.0
    %134 = vmatprep.subr.mxu0 0.0
    %135 = vmatpush1.msra.mxu0 0.0
    %136 = vmatprep.subr.mxu0 0.0
    %137 = vmatpush1.msra.mxu0 0.0
    %138 = vmatprep.subr.mxu0 0.0
    %139 = vmatpush1.msra.mxu0 0.0
    %140 = vmatprep.subr.mxu0 0.0
    %141 = vmatpush1.msra.mxu0 0.0
    %142 = vmatprep.subr.mxu0 0.0
    %143 = vmatpush1.msra.mxu0 0.0
    %144 = vmatprep.subr.mxu0 0.0
    %145 = vmatpush1.msra.mxu0 0.0
    %146 = vmatprep.subr.mxu0 0.0
    %147 = vmatpush1.msra.mxu0 0.0
    %148 = vmatprep.subr.mxu0 0.0
    %149 = vmatpush1.msra.mxu0 0.0
    %150 = vmatprep.subr.mxu0 0.0
    %151 = vmatpush1.msra.mxu0 0.0
    %152 = vmatprep.subr.mxu0 0.0
    %153 = vmatpush1.msra.mxu0 0.0
    %154 = vmatprep.subr.mxu0 0.0
    %155 = vmatpush1.msra.mxu0 0.0
    %156 = vmatprep.subr.mxu0 0.0
    %157 = vmatpush1.msra.mxu0 0.0
    %158 = vmatprep.subr.mxu0 0.0
    %159 = vmatpush1.msra.mxu0 0.0
    %160 = vmatprep.subr.mxu0 0.0
    %161 = vmatpush1.msra.mxu0 0.0
    %162 = vmatprep.subr.mxu0 0.0
    %163 = vmatpush1.msra.mxu0 0.0
    %164 = vmatprep.subr.mxu0 0.0
    %165 = vmatpush1.msra.mxu0 0.0
    %166 = vmatprep.subr.mxu0 0.0
    %167 = vmatpush1.msra.mxu0 0.0
    %168 = vmatprep.subr.mxu0 0.0
    %169 = vmatpush1.msra.mxu0 0.0
    %170 = vmatprep.subr.mxu0 0.0
    %171 = vmatpush1.msra.mxu0 0.0
    %172 = vmatprep.subr.mxu0 0.0
    %173 = vmatpush1.msra.mxu0 0.0
    %174 = vmatprep.subr.mxu0 0.0
    %175 = vmatpush1.msra.mxu0 0.0
    %176 = vmatprep.subr.mxu0 0.0
    %177 = vmatpush1.msra.mxu0 0.0
    %178 = vmatprep.subr.mxu0 0.0
    %179 = vmatpush1.msra.mxu0 0.0
    %180 = vmatprep.subr.mxu0 0.0
    %181 = vmatpush1.msra.mxu0 0.0
    %182 = vmatprep.subr.mxu0 0.0
    %183 = vmatpush1.msra.mxu0 0.0
    %184 = vmatprep.subr.mxu0 0.0
    %185 = vmatpush1.msra.mxu0 0.0
    %186 = vmatprep.mubr.f32.mxu0 0.0
    %v187 = vand.u32 %v33, 4294901760
    %188 = vmatmul.mubr.f32.gmra.mrb[0].mxu0 %v187
    %v189 = vpop.f32.mrb[0].mxu0
    %v190 = vadd.f32 %v109, %v189
    %v191 = vpop.f32.mrb[0].mxu0
    %192 = vdwg.mxu0
    %193 = vmatprep.subr.mxu0 0.0
    %v194 = vand.u32 %v22, 4294901760
    %v195 = vsub.f32 %v22, %v194
    %196 = vmatpush1.msra.mxu0 %v195
    %197 = vmatprep.subr.mxu0 0.0
    %v198 = vand.u32 %v23, 4294901760
    %v199 = vsub.f32 %v23, %v198
    %200 = vmatpush1.msra.mxu0 %v199
    %201 = vmatprep.subr.mxu0 0.0
    %202 = vmatpush1.msra.mxu0 0.0
    %203 = vmatprep.subr.mxu0 0.0
    %204 = vmatpush1.msra.mxu0 0.0
    %205 = vmatprep.subr.mxu0 0.0
    %206 = vmatpush1.msra.mxu0 0.0
    %207 = vmatprep.subr.mxu0 0.0
    %208 = vmatpush1.msra.mxu0 0.0
    %209 = vmatprep.subr.mxu0 0.0
    %210 = vmatpush1.msra.mxu0 0.0
    %211 = vmatprep.subr.mxu0 0.0
    %212 = vmatpush1.msra.mxu0 0.0
    %213 = vmatprep.subr.mxu0 0.0
    %214 = vmatpush1.msra.mxu0 0.0
    %215 = vmatprep.subr.mxu0 0.0
    %216 = vmatpush1.msra.mxu0 0.0
    %217 = vmatprep.subr.mxu0 0.0
    %218 = vmatpush1.msra.mxu0 0.0
    %219 = vmatprep.subr.mxu0 0.0
    %220 = vmatpush1.msra.mxu0 0.0
    %221 = vmatprep.subr.mxu0 0.0
    %222 = vmatpush1.msra.mxu0 0.0
    %223 = vmatprep.subr.mxu0 0.0
    %224 = vmatpush1.msra.mxu0 0.0
    %225 = vmatprep.subr.mxu0 0.0
    %226 = vmatpush1.msra.mxu0 0.0
    %227 = vmatprep.subr.mxu0 0.0
    %228 = vmatpush1.msra.mxu0 0.0
    %229 = vmatprep.subr.mxu0 0.0
    %230 = vmatpush1.msra.mxu0 0.0
    %231 = vmatprep.subr.mxu0 0.0
    %232 = vmatpush1.msra.mxu0 0.0
    %233 = vmatprep.subr.mxu0 0.0
    %234 = vmatpush1.msra.mxu0 0.0
    %235 = vmatprep.subr.mxu0 0.0
    %236 = vmatpush1.msra.mxu0 0.0
    %237 = vmatprep.subr.mxu0 0.0
    %238 = vmatpush1.msra.mxu0 0.0
    %239 = vmatprep.subr.mxu0 0.0
    %240 = vmatpush1.msra.mxu0 0.0
    %241 = vmatprep.subr.mxu0 0.0
    %242 = vmatpush1.msra.mxu0 0.0
    %243 = vmatprep.subr.mxu0 0.0
    %244 = vmatpush1.msra.mxu0 0.0
    %245 = vmatprep.subr.mxu0 0.0
    %246 = vmatpush1.msra.mxu0 0.0
    %247 = vmatprep.subr.mxu0 0.0
    %248 = vmatpush1.msra.mxu0 0.0
    %249 = vmatprep.subr.mxu0 0.0
    %250 = vmatpush1.msra.mxu0 0.0
    %251 = vmatprep.subr.mxu0 0.0
    %252 = vmatpush1.msra.mxu0 0.0
    %253 = vmatprep.subr.mxu0 0.0
    %254 = vmatpush1.msra.mxu0 0.0
    %255 = vmatprep.subr.mxu0 0.0
    %256 = vmatpush1.msra.mxu0 0.0
    %257 = vmatprep.subr.mxu0 0.0
    %258 = vmatpush1.msra.mxu0 0.0
    %259 = vmatprep.subr.mxu0 0.0
    %260 = vmatpush1.msra.mxu0 0.0
    %261 = vmatprep.mubr.f32.mxu0 0.0
    %v262 = vand.u32 %v33, 4294901760
    %v263 = vsub.f32 %v33, %v262
    %264 = vmatmul.mubr.f32.gmra.mrb[0].mxu0 %v263
    %v265 = vpop.f32.mrb[0].mxu0
    %v266 = vadd.f32 %v190, %v265
    %v267 = vpop.f32.mrb[0].mxu0
    %268 = vdwg.mxu0
    %269 = vmatprep.subr.mxu0 0.0
    %v270 = vand.u32 %v22, 4294901760
    %271 = vmatpush1.msra.mxu0 %v270
    %272 = vmatprep.subr.mxu0 0.0
    %v273 = vand.u32 %v23, 4294901760
    %274 = vmatpush1.msra.mxu0 %v273
    %275 = vmatprep.subr.mxu0 0.0
    %276 = vmatpush1.msra.mxu0 0.0
    %277 = vmatprep.subr.mxu0 0.0
    %278 = vmatpush1.msra.mxu0 0.0
    %279 = vmatprep.subr.mxu0 0.0
    %280 = vmatpush1.msra.mxu0 0.0
    %281 = vmatprep.subr.mxu0 0.0
    %282 = vmatpush1.msra.mxu0 0.0
    %283 = vmatprep.subr.mxu0 0.0
    %284 = vmatpush1.msra.mxu0 0.0
    %285 = vmatprep.subr.mxu0 0.0
    %286 = vmatpush1.msra.mxu0 0.0
    %287 = vmatprep.subr.mxu0 0.0
    %288 = vmatpush1.msra.mxu0 0.0
    %289 = vmatprep.subr.mxu0 0.0
    %290 = vmatpush1.msra.mxu0 0.0
    %291 = vmatprep.subr.mxu0 0.0
    %292 = vmatpush1.msra.mxu0 0.0
    %293 = vmatprep.subr.mxu0 0.0
    %294 = vmatpush1.msra.mxu0 0.0
    %295 = vmatprep.subr.mxu0 0.0
    %296 = vmatpush1.msra.mxu0 0.0
    %297 = vmatprep.subr.mxu0 0.0
    %298 = vmatpush1.msra.mxu0 0.0
    %299 = vmatprep.subr.mxu0 0.0
    %300 = vmatpush1.msra.mxu0 0.0
    %301 = vmatprep.subr.mxu0 0.0
    %302 = vmatpush1.msra.mxu0 0.0
    %303 = vmatprep.subr.mxu0 0.0
    %304 = vmatpush1.msra.mxu0 0.0
    %305 = vmatprep.subr.mxu0 0.0
    %306 = vmatpush1.msra.mxu0 0.0
    %307 = vmatprep.subr.mxu0 0.0
    %308 = vmatpush1.msra.mxu0 0.0
    %309 = vmatprep.subr.mxu0 0.0
    %310 = vmatpush1.msra.mxu0 0.0
    %311 = vmatprep.subr.mxu0 0.0
    %312 = vmatpush1.msra.mxu0 0.0
    %313 = vmatprep.subr.mxu0 0.0
    %314 = vmatpush1.msra.mxu0 0.0
    %315 = vmatprep.subr.mxu0 0.0
    %316 = vmatpush1.msra.mxu0 0.0
    %317 = vmatprep.subr.mxu0 0.0
    %318 = vmatpush1.msra.mxu0 0.0
    %319 = vmatprep.subr.mxu0 0.0
    %320 = vmatpush1.msra.mxu0 0.0
    %321 = vmatprep.subr.mxu0 0.0
    %322 = vmatpush1.msra.mxu0 0.0
    %323 = vmatprep.subr.mxu0 0.0
    %324 = vmatpush1.msra.mxu0 0.0
    %325 = vmatprep.subr.mxu0 0.0
    %326 = vmatpush1.msra.mxu0 0.0
    %327 = vmatprep.subr.mxu0 0.0
    %328 = vmatpush1.msra.mxu0 0.0
    %329 = vmatprep.subr.mxu0 0.0
    %330 = vmatpush1.msra.mxu0 0.0
    %331 = vmatprep.subr.mxu0 0.0
    %332 = vmatpush1.msra.mxu0 0.0
    %333 = vmatprep.subr.mxu0 0.0
    %334 = vmatpush1.msra.mxu0 0.0
    %335 = vmatprep.mubr.f32.mxu0 0.0
    %v336 = vand.u32 %v33, 4294901760
    %v337 = vsub.f32 %v33, %v336
    %v338 = vand.u32 %v337, 4294901760
    %339 = vmatmul.mubr.f32.gmra.mrb[0].mxu0 %v338
    %v340 = vpop.f32.mrb[0].mxu0
    %v341 = vadd.f32 %v266, %v340
    %v342 = vpop.f32.mrb[0].mxu0
    %343 = vdwg.mxu0
    %344 = vmatprep.subr.mxu0 0.0
    %v345 = vand.u32 %v22, 4294901760
    %v346 = vsub.f32 %v22, %v345
    %v347 = vand.u32 %v346, 4294901760
    %348 = vmatpush1.msra.mxu0 %v347
    %349 = vmatprep.subr.mxu0 0.0
    %v350 = vand.u32 %v23, 4294901760
    %v351 = vsub.f32 %v23, %v350
    %v352 = vand.u32 %v351, 4294901760
    %353 = vmatpush1.msra.mxu0 %v352
    %354 = vmatprep.subr.mxu0 0.0
    %355 = vmatpush1.msra.mxu0 0.0
    %356 = vmatprep.subr.mxu0 0.0
    %357 = vmatpush1.msra.mxu0 0.0
    %358 = vmatprep.subr.mxu0 0.0
    %359 = vmatpush1.msra.mxu0 0.0
    %360 = vmatprep.subr.mxu0 0.0
    %361 = vmatpush1.msra.mxu0 0.0
    %362 = vmatprep.subr.mxu0 0.0
    %363 = vmatpush1.msra.mxu0 0.0
    %364 = vmatprep.subr.mxu0 0.0
    %365 = vmatpush1.msra.mxu0 0.0
    %366 = vmatprep.subr.mxu0 0.0
    %367 = vmatpush1.msra.mxu0 0.0
    %368 = vmatprep.subr.mxu0 0.0
    %369 = vmatpush1.msra.mxu0 0.0
    %370 = vmatprep.subr.mxu0 0.0
    %371 = vmatpush1.msra.mxu0 0.0
    %372 = vmatprep.subr.mxu0 0.0
    %373 = vmatpush1.msra.mxu0 0.0
    %374 = vmatprep.subr.mxu0 0.0
    %375 = vmatpush1.msra.mxu0 0.0
    %376 = vmatprep.subr.mxu0 0.0
    %377 = vmatpush1.msra.mxu0 0.0
    %378 = vmatprep.subr.mxu0 0.0
    %379 = vmatpush1.msra.mxu0 0.0
    %380 = vmatprep.subr.mxu0 0.0
    %381 = vmatpush1.msra.mxu0 0.0
    %382 = vmatprep.subr.mxu0 0.0
    %383 = vmatpush1.msra.mxu0 0.0
    %384 = vmatprep.subr.mxu0 0.0
    %385 = vmatpush1.msra.mxu0 0.0
    %386 = vmatprep.subr.mxu0 0.0
    %387 = vmatpush1.msra.mxu0 0.0
    %388 = vmatprep.subr.mxu0 0.0
    %389 = vmatpush1.msra.mxu0 0.0
    %390 = vmatprep.subr.mxu0 0.0
    %391 = vmatpush1.msra.mxu0 0.0
    %392 = vmatprep.subr.mxu0 0.0
    %393 = vmatpush1.msra.mxu0 0.0
    %394 = vmatprep.subr.mxu0 0.0
    %395 = vmatpush1.msra.mxu0 0.0
    %396 = vmatprep.subr.mxu0 0.0
    %397 = vmatpush1.msra.mxu0 0.0
    %398 = vmatprep.subr.mxu0 0.0
    %399 = vmatpush1.msra.mxu0 0.0
    %400 = vmatprep.subr.mxu0 0.0
    %401 = vmatpush1.msra.mxu0 0.0
    %402 = vmatprep.subr.mxu0 0.0
    %403 = vmatpush1.msra.mxu0 0.0
    %404 = vmatprep.subr.mxu0 0.0
    %405 = vmatpush1.msra.mxu0 0.0
    %406 = vmatprep.subr.mxu0 0.0
    %407 = vmatpush1.msra.mxu0 0.0
    %408 = vmatprep.subr.mxu0 0.0
    %409 = vmatpush1.msra.mxu0 0.0
    %410 = vmatprep.subr.mxu0 0.0
    %411 = vmatpush1.msra.mxu0 0.0
    %412 = vmatprep.subr.mxu0 0.0
    %413 = vmatpush1.msra.mxu0 0.0
    %414 = vmatprep.mubr.f32.mxu0 0.0
    %v415 = vand.u32 %v33, 4294901760
    %416 = vmatmul.mubr.f32.gmra.mrb[0].mxu0 %v415
    %v417 = vpop.f32.mrb[0].mxu0
    %v418 = vadd.f32 %v341, %v417
    %v419 = vpop.f32.mrb[0].mxu0
    %420 = vdwg.mxu0
    %421 = vmatprep.subr.mxu0 0.0
    %v422 = vand.u32 %v22, 4294901760
    %423 = vmatpush1.msra.mxu0 %v422
    %424 = vmatprep.subr.mxu0 0.0
    %v425 = vand.u32 %v23, 4294901760
    %426 = vmatpush1.msra.mxu0 %v425
    %427 = vmatprep.subr.mxu0 0.0
    %428 = vmatpush1.msra.mxu0 0.0
    %429 = vmatprep.subr.mxu0 0.0
    %430 = vmatpush1.msra.mxu0 0.0
    %431 = vmatprep.subr.mxu0 0.0
    %432 = vmatpush1.msra.mxu0 0.0
    %433 = vmatprep.subr.mxu0 0.0
    %434 = vmatpush1.msra.mxu0 0.0
    %435 = vmatprep.subr.mxu0 0.0
    %436 = vmatpush1.msra.mxu0 0.0
    %437 = vmatprep.subr.mxu0 0.0
    %438 = vmatpush1.msra.mxu0 0.0
    %439 = vmatprep.subr.mxu0 0.0
    %440 = vmatpush1.msra.mxu0 0.0
    %441 = vmatprep.subr.mxu0 0.0
    %442 = vmatpush1.msra.mxu0 0.0
    %443 = vmatprep.subr.mxu0 0.0
    %444 = vmatpush1.msra.mxu0 0.0
    %445 = vmatprep.subr.mxu0 0.0
    %446 = vmatpush1.msra.mxu0 0.0
    %447 = vmatprep.subr.mxu0 0.0
    %448 = vmatpush1.msra.mxu0 0.0
    %449 = vmatprep.subr.mxu0 0.0
    %450 = vmatpush1.msra.mxu0 0.0
    %451 = vmatprep.subr.mxu0 0.0
    %452 = vmatpush1.msra.mxu0 0.0
    %453 = vmatprep.subr.mxu0 0.0
    %454 = vmatpush1.msra.mxu0 0.0
    %455 = vmatprep.subr.mxu0 0.0
    %456 = vmatpush1.msra.mxu0 0.0
    %457 = vmatprep.subr.mxu0 0.0
    %458 = vmatpush1.msra.mxu0 0.0
    %459 = vmatprep.subr.mxu0 0.0
    %460 = vmatpush1.msra.mxu0 0.0
    %461 = vmatprep.subr.mxu0 0.0
    %462 = vmatpush1.msra.mxu0 0.0
    %463 = vmatprep.subr.mxu0 0.0
    %464 = vmatpush1.msra.mxu0 0.0
    %465 = vmatprep.subr.mxu0 0.0
    %466 = vmatpush1.msra.mxu0 0.0
    %467 = vmatprep.subr.mxu0 0.0
    %468 = vmatpush1.msra.mxu0 0.0
    %469 = vmatprep.subr.mxu0 0.0
    %470 = vmatpush1.msra.mxu0 0.0
    %471 = vmatprep.subr.mxu0 0.0
    %472 = vmatpush1.msra.mxu0 0.0
    %473 = vmatprep.subr.mxu0 0.0
    %474 = vmatpush1.msra.mxu0 0.0
    %475 = vmatprep.subr.mxu0 0.0
    %476 = vmatpush1.msra.mxu0 0.0
    %477 = vmatprep.subr.mxu0 0.0
    %478 = vmatpush1.msra.mxu0 0.0
    %479 = vmatprep.subr.mxu0 0.0
    %480 = vmatpush1.msra.mxu0 0.0
    %481 = vmatprep.subr.mxu0 0.0
    %482 = vmatpush1.msra.mxu0 0.0
    %483 = vmatprep.subr.mxu0 0.0
    %484 = vmatpush1.msra.mxu0 0.0
    %485 = vmatprep.subr.mxu0 0.0
    %486 = vmatpush1.msra.mxu0 0.0
    %487 = vmatprep.mubr.f32.mxu0 0.0
    %v488 = vand.u32 %v33, 4294901760
    %489 = vmatmul.mubr.f32.gmra.mrb[0].mxu0 %v488
    %v490 = vpop.f32.mrb[0].mxu0
    %v491 = vadd.f32 %v418, %v490
    %v492 = vpop.f32.mrb[0].mxu0
    %493 = vdwg.mxu0
    %v494 = vmax.f32 %v491, 0.0
    %v495 = vld [vmem:[%s3] sm:$0xff]
    %v496 = vld [vmem:[%s3 + $0x8] sm:$0xff]
    %v497 = vld [vmem:[%s3 + $0x10] sm:$0xff]
    %v498 = vld [vmem:[%s3 + $0x18] sm:$0xff]
    %v499 = vld [vmem:[%s4] sm:$0x1]
    %v501 = vlaneseq
    %v502 = vshrl.u32 %v501, 7
    %v503 = vsub.s32 0, %v502
    %v504 = vrot.slane %v499, %v503
    %vm506 = vcmask 261120
    %v508 = vsel %vm506, %v494, 0
    %510 = vmatprep.subr.mxu0 0.0
    %v511 = vand.u32 %v495, 4294901760
    %512 = vmatpush1.msra.mxu0 %v511
    %513 = vmatprep.subr.mxu0 0.0
    %v514 = vand.u32 %v496, 4294901760
    %515 = vmatpush1.msra.mxu0 %v514
    %516 = vmatprep.subr.mxu0 0.0
    %v517 = vand.u32 %v497, 4294901760
    %518 = vmatpush1.msra.mxu0 %v517
    %519 = vmatprep.subr.mxu0 0.0
    %v520 = vand.u32 %v498, 4294901760
    %521 = vmatpush1.msra.mxu0 %v520
    %522 = vmatprep.subr.mxu0 0.0
    %523 = vmatpush1.msra.mxu0 0.0
    %524 = vmatprep.subr.mxu0 0.0
    %525 = vmatpush1.msra.mxu0 0.0
    %526 = vmatprep.subr.mxu0 0.0
    %527 = vmatpush1.msra.mxu0 0.0
    %528 = vmatprep.subr.mxu0 0.0
    %529 = vmatpush1.msra.mxu0 0.0
    %530 = vmatprep.subr.mxu0 0.0
    %531 = vmatpush1.msra.mxu0 0.0
    %532 = vmatprep.subr.mxu0 0.0
    %533 = vmatpush1.msra.mxu0 0.0
    %534 = vmatprep.subr.mxu0 0.0
    %535 = vmatpush1.msra.mxu0 0.0
    %536 = vmatprep.subr.mxu0 0.0
    %537 = vmatpush1.msra.mxu0 0.0
    %538 = vmatprep.subr.mxu0 0.0
    %539 = vmatpush1.msra.mxu0 0.0
    %540 = vmatprep.subr.mxu0 0.0
    %541 = vmatpush1.msra.mxu0 0.0
    %542 = vmatprep.subr.mxu0 0.0
    %543 = vmatpush1.msra.mxu0 0.0
    %544 = vmatprep.subr.mxu0 0.0
    %545 = vmatpush1.msra.mxu0 0.0
    %546 = vmatprep.subr.mxu0 0.0
    %547 = vmatpush1.msra.mxu0 0.0
    %548 = vmatprep.subr.mxu0 0.0
    %549 = vmatpush1.msra.mxu0 0.0
    %550 = vmatprep.subr.mxu0 0.0
    %551 = vmatpush1.msra.mxu0 0.0
    %552 = vmatprep.subr.mxu0 0.0
    %553 = vmatpush1.msra.mxu0 0.0
    %554 = vmatprep.subr.mxu0 0.0
    %555 = vmatpush1.msra.mxu0 0.0
    %556 = vmatprep.subr.mxu0 0.0
    %557 = vmatpush1.msra.mxu0 0.0
    %558 = vmatprep.subr.mxu0 0.0
    %559 = vmatpush1.msra.mxu0 0.0
    %560 = vmatprep.subr.mxu0 0.0
    %561 = vmatpush1.msra.mxu0 0.0
    %562 = vmatprep.subr.mxu0 0.0
    %563 = vmatpush1.msra.mxu0 0.0
    %564 = vmatprep.subr.mxu0 0.0
    %565 = vmatpush1.msra.mxu0 0.0
    %566 = vmatprep.subr.mxu0 0.0
    %567 = vmatpush1.msra.mxu0 0.0
    %568 = vmatprep.subr.mxu0 0.0
    %569 = vmatpush1.msra.mxu0 0.0
    %570 = vmatprep.subr.mxu0 0.0
    %571 = vmatpush1.msra.mxu0 0.0
    %572 = vmatprep.subr.mxu0 0.0
    %573 = vmatpush1.msra.mxu0 0.0
    %574 = vmatprep.subr.mxu0 0.0
    %575 = vmatpush1.msra.mxu0 0.0
    %576 = vmatprep.subr.mxu0 0.0
    %577 = vmatpush1.msra.mxu0 0.0
    %578 = vmatprep.mubr.f32.mxu0 0.0
    %v579 = vand.u32 %v508, 4294901760
    %v580 = vsub.f32 %v508, %v579
    %v581 = vand.u32 %v580, 4294901760
    %v582 = vsub.f32 %v580, %v581
    %v583 = vand.u32 %v582, 4294901760
    %584 = vmatmul.mubr.f32.gmra.mrb[0].mxu0 %v583
    %v585 = vpop.f32.mrb[0].mxu0
    %v586 = vadd.f32 %v504, %v585
    %v587 = vpop.f32.mrb[0].mxu0
    %588 = vdwg.mxu0
    %589 = vmatprep.subr.mxu0 0.0
    %v590 = vand.u32 %v495, 4294901760
    %v591 = vsub.f32 %v495, %v590
    %v592 = vand.u32 %v591, 4294901760
    %v593 = vsub.f32 %v591, %v592
    %v594 = vand.u32 %v593, 4294901760
    %595 = vmatpush1.msra.mxu0 %v594
    %596 = vmatprep.subr.mxu0 0.0
    %v597 = vand.u32 %v496, 4294901760
    %v598 = vsub.f32 %v496, %v597
    %v599 = vand.u32 %v598, 4294901760
    %v600 = vsub.f32 %v598, %v599
    %v601 = vand.u32 %v600, 4294901760
    %602 = vmatpush1.msra.mxu0 %v601
    %603 = vmatprep.subr.mxu0 0.0
    %v604 = vand.u32 %v497, 4294901760
    %v605 = vsub.f32 %v497, %v604
    %v606 = vand.u32 %v605, 4294901760
    %v607 = vsub.f32 %v605, %v606
    %v608 = vand.u32 %v607, 4294901760
    %609 = vmatpush1.msra.mxu0 %v608
    %610 = vmatprep.subr.mxu0 0.0
    %v611 = vand.u32 %v498, 4294901760
    %v612 = vsub.f32 %v498, %v611
    %v613 = vand.u32 %v612, 4294901760
    %v614 = vsub.f32 %v612, %v613
    %v615 = vand.u32 %v614, 4294901760
    %616 = vmatpush1.msra.mxu0 %v615
    %617 = vmatprep.subr.mxu0 0.0
    %618 = vmatpush1.msra.mxu0 0.0
    %619 = vmatprep.subr.mxu0 0.0
    %620 = vmatpush1.msra.mxu0 0.0
    %621 = vmatprep.subr.mxu0 0.0
    %622 = vmatpush1.msra.mxu0 0.0
    %623 = vmatprep.subr.mxu0 0.0
    %624 = vmatpush1.msra.mxu0 0.0
    %625 = vmatprep.subr.mxu0 0.0
    %626 = vmatpush1.msra.mxu0 0.0
    %627 = vmatprep.subr.mxu0 0.0
    %628 = vmatpush1.msra.mxu0 0.0
    %629 = vmatprep.subr.mxu0 0.0
    %630 = vmatpush1.msra.mxu0 0.0
    %631 = vmatprep.subr.mxu0 0.0
    %632 = vmatpush1.msra.mxu0 0.0
    %633 = vmatprep.subr.mxu0 0.0
    %634 = vmatpush1.msra.mxu0 0.0
    %635 = vmatprep.subr.mxu0 0.0
    %636 = vmatpush1.msra.mxu0 0.0
    %637 = vmatprep.subr.mxu0 0.0
    %638 = vmatpush1.msra.mxu0 0.0
    %639 = vmatprep.subr.mxu0 0.0
    %640 = vmatpush1.msra.mxu0 0.0
    %641 = vmatprep.subr.mxu0 0.0
    %642 = vmatpush1.msra.mxu0 0.0
    %643 = vmatprep.subr.mxu0 0.0
    %644 = vmatpush1.msra.mxu0 0.0
    %645 = vmatprep.subr.mxu0 0.0
    %646 = vmatpush1.msra.mxu0 0.0
    %647 = vmatprep.subr.mxu0 0.0
    %648 = vmatpush1.msra.mxu0 0.0
    %649 = vmatprep.subr.mxu0 0.0
    %650 = vmatpush1.msra.mxu0 0.0
    %651 = vmatprep.subr.mxu0 0.0
    %652 = vmatpush1.msra.mxu0 0.0
    %653 = vmatprep.subr.mxu0 0.0
    %654 = vmatpush1.msra.mxu0 0.0
    %655 = vmatprep.subr.mxu0 0.0
    %656 = vmatpush1.msra.mxu0 0.0
    %657 = vmatprep.subr.mxu0 0.0
    %658 = vmatpush1.msra.mxu0 0.0
    %659 = vmatprep.subr.mxu0 0.0
    %660 = vmatpush1.msra.mxu0 0.0
    %661 = vmatprep.subr.mxu0 0.0
    %662 = vmatpush1.msra.mxu0 0.0
    %663 = vmatprep.subr.mxu0 0.0
    %664 = vmatpush1.msra.mxu0 0.0
    %665 = vmatprep.subr.mxu0 0.0
    %666 = vmatpush1.msra.mxu0 0.0
    %667 = vmatprep.subr.mxu0 0.0
    %668 = vmatpush1.msra.mxu0 0.0
    %669 = vmatprep.subr.mxu0 0.0
    %670 = vmatpush1.msra.mxu0 0.0
    %671 = vmatprep.subr.mxu0 0.0
    %672 = vmatpush1.msra.mxu0 0.0
    %673 = vmatprep.mubr.f32.mxu0 0.0
    %v674 = vand.u32 %v508, 4294901760
    %675 = vmatmul.mubr.f32.gmra.mrb[0].mxu0 %v674
    %v676 = vpop.f32.mrb[0].mxu0
    %v677 = vadd.f32 %v586, %v676
    %v678 = vpop.f32.mrb[0].mxu0
    %679 = vdwg.mxu0
    %680 = vmatprep.subr.mxu0 0.0
    %v681 = vand.u32 %v495, 4294901760
    %v682 = vsub.f32 %v495, %v681
    %683 = vmatpush1.msra.mxu0 %v682
    %684 = vmatprep.subr.mxu0 0.0
    %v685 = vand.u32 %v496, 4294901760
    %v686 = vsub.f32 %v496, %v685
    %687 = vmatpush1.msra.mxu0 %v686
    %688 = vmatprep.subr.mxu0 0.0
    %v689 = vand.u32 %v497, 4294901760
    %v690 = vsub.f32 %v497, %v689
    %691 = vmatpush1.msra.mxu0 %v690
    %692 = vmatprep.subr.mxu0 0.0
    %v693 = vand.u32 %v498, 4294901760
    %v694 = vsub.f32 %v498, %v693
    %695 = vmatpush1.msra.mxu0 %v694
    %696 = vmatprep.subr.mxu0 0.0
    %697 = vmatpush1.msra.mxu0 0.0
    %698 = vmatprep.subr.mxu0 0.0
    %699 = vmatpush1.msra.mxu0 0.0
    %700 = vmatprep.subr.mxu0 0.0
    %701 = vmatpush1.msra.mxu0 0.0
    %702 = vmatprep.subr.mxu0 0.0
    %703 = vmatpush1.msra.mxu0 0.0
    %704 = vmatprep.subr.mxu0 0.0
    %705 = vmatpush1.msra.mxu0 0.0
    %706 = vmatprep.subr.mxu0 0.0
    %707 = vmatpush1.msra.mxu0 0.0
    %708 = vmatprep.subr.mxu0 0.0
    %709 = vmatpush1.msra.mxu0 0.0
    %710 = vmatprep.subr.mxu0 0.0
    %711 = vmatpush1.msra.mxu0 0.0
    %712 = vmatprep.subr.mxu0 0.0
    %713 = vmatpush1.msra.mxu0 0.0
    %714 = vmatprep.subr.mxu0 0.0
    %715 = vmatpush1.msra.mxu0 0.0
    %716 = vmatprep.subr.mxu0 0.0
    %717 = vmatpush1.msra.mxu0 0.0
    %718 = vmatprep.subr.mxu0 0.0
    %719 = vmatpush1.msra.mxu0 0.0
    %720 = vmatprep.subr.mxu0 0.0
    %721 = vmatpush1.msra.mxu0 0.0
    %722 = vmatprep.subr.mxu0 0.0
    %723 = vmatpush1.msra.mxu0 0.0
    %724 = vmatprep.subr.mxu0 0.0
    %725 = vmatpush1.msra.mxu0 0.0
    %726 = vmatprep.subr.mxu0 0.0
    %727 = vmatpush1.msra.mxu0 0.0
    %728 = vmatprep.subr.mxu0 0.0
    %729 = vmatpush1.msra.mxu0 0.0
    %730 = vmatprep.subr.mxu0 0.0
    %731 = vmatpush1.msra.mxu0 0.0
    %732 = vmatprep.subr.mxu0 0.0
    %733 = vmatpush1.msra.mxu0 0.0
    %734 = vmatprep.subr.mxu0 0.0
    %735 = vmatpush1.msra.mxu0 0.0
    %736 = vmatprep.subr.mxu0 0.0
    %737 = vmatpush1.msra.mxu0 0.0
    %738 = vmatprep.subr.mxu0 0.0
    %739 = vmatpush1.msra.mxu0 0.0
    %740 = vmatprep.subr.mxu0 0.0
    %741 = vmatpush1.msra.mxu0 0.0
    %742 = vmatprep.subr.mxu0 0.0
    %743 = vmatpush1.msra.mxu0 0.0
    %744 = vmatprep.subr.mxu0 0.0
    %745 = vmatpush1.msra.mxu0 0.0
    %746 = vmatprep.subr.mxu0 0.0
    %747 = vmatpush1.msra.mxu0 0.0
    %748 = vmatprep.subr.mxu0 0.0
    %749 = vmatpush1.msra.mxu0 0.0
    %750 = vmatprep.subr.mxu0 0.0
    %751 = vmatpush1.msra.mxu0 0.0
    %752 = vmatprep.mubr.f32.mxu0 0.0
    %v753 = vand.u32 %v508, 4294901760
    %v754 = vsub.f32 %v508, %v753
    %755 = vmatmul.mubr.f32.gmra.mrb[0].mxu0 %v754
    %v756 = vpop.f32.mrb[0].mxu0
    %v757 = vadd.f32 %v677, %v756
    %v758 = vpop.f32.mrb[0].mxu0
    %759 = vdwg.mxu0
    %760 = vmatprep.subr.mxu0 0.0
    %v761 = vand.u32 %v495, 4294901760
    %762 = vmatpush1.msra.mxu0 %v761
    %763 = vmatprep.subr.mxu0 0.0
    %v764 = vand.u32 %v496, 4294901760
    %765 = vmatpush1.msra.mxu0 %v764
    %766 = vmatprep.subr.mxu0 0.0
    %v767 = vand.u32 %v497, 4294901760
    %768 = vmatpush1.msra.mxu0 %v767
    %769 = vmatprep.subr.mxu0 0.0
    %v770 = vand.u32 %v498, 4294901760
    %771 = vmatpush1.msra.mxu0 %v770
    %772 = vmatprep.subr.mxu0 0.0
    %773 = vmatpush1.msra.mxu0 0.0
    %774 = vmatprep.subr.mxu0 0.0
    %775 = vmatpush1.msra.mxu0 0.0
    %776 = vmatprep.subr.mxu0 0.0
    %777 = vmatpush1.msra.mxu0 0.0
    %778 = vmatprep.subr.mxu0 0.0
    %779 = vmatpush1.msra.mxu0 0.0
    %780 = vmatprep.subr.mxu0 0.0
    %781 = vmatpush1.msra.mxu0 0.0
    %782 = vmatprep.subr.mxu0 0.0
    %783 = vmatpush1.msra.mxu0 0.0
    %784 = vmatprep.subr.mxu0 0.0
    %785 = vmatpush1.msra.mxu0 0.0
    %786 = vmatprep.subr.mxu0 0.0
    %787 = vmatpush1.msra.mxu0 0.0
    %788 = vmatprep.subr.mxu0 0.0
    %789 = vmatpush1.msra.mxu0 0.0
    %790 = vmatprep.subr.mxu0 0.0
    %791 = vmatpush1.msra.mxu0 0.0
    %792 = vmatprep.subr.mxu0 0.0
    %793 = vmatpush1.msra.mxu0 0.0
    %794 = vmatprep.subr.mxu0 0.0
    %795 = vmatpush1.msra.mxu0 0.0
    %796 = vmatprep.subr.mxu0 0.0
    %797 = vmatpush1.msra.mxu0 0.0
    %798 = vmatprep.subr.mxu0 0.0
    %799 = vmatpush1.msra.mxu0 0.0
    %800 = vmatprep.subr.mxu0 0.0
    %801 = vmatpush1.msra.mxu0 0.0
    %802 = vmatprep.subr.mxu0 0.0
    %803 = vmatpush1.msra.mxu0 0.0
    %804 = vmatprep.subr.mxu0 0.0
    %805 = vmatpush1.msra.mxu0 0.0
    %806 = vmatprep.subr.mxu0 0.0
    %807 = vmatpush1.msra.mxu0 0.0
    %808 = vmatprep.subr.mxu0 0.0
    %809 = vmatpush1.msra.mxu0 0.0
    %810 = vmatprep.subr.mxu0 0.0
    %811 = vmatpush1.msra.mxu0 0.0
    %812 = vmatprep.subr.mxu0 0.0
    %813 = vmatpush1.msra.mxu0 0.0
    %814 = vmatprep.subr.mxu0 0.0
    %815 = vmatpush1.msra.mxu0 0.0
    %816 = vmatprep.subr.mxu0 0.0
    %817 = vmatpush1.msra.mxu0 0.0
    %818 = vmatprep.subr.mxu0 0.0
    %819 = vmatpush1.msra.mxu0 0.0
    %820 = vmatprep.subr.mxu0 0.0
    %821 = vmatpush1.msra.mxu0 0.0
    %822 = vmatprep.subr.mxu0 0.0
    %823 = vmatpush1.msra.mxu0 0.0
    %824 = vmatprep.subr.mxu0 0.0
    %825 = vmatpush1.msra.mxu0 0.0
    %826 = vmatprep.subr.mxu0 0.0
    %827 = vmatpush1.msra.mxu0 0.0
    %828 = vmatprep.mubr.f32.mxu0 0.0
    %v829 = vand.u32 %v508, 4294901760
    %v830 = vsub.f32 %v508, %v829
    %v831 = vand.u32 %v830, 4294901760
    %832 = vmatmul.mubr.f32.gmra.mrb[0].mxu0 %v831
    %v833 = vpop.f32.mrb[0].mxu0
    %v834 = vadd.f32 %v757, %v833
    %v835 = vpop.f32.mrb[0].mxu0
    %836 = vdwg.mxu0
    %837 = vmatprep.subr.mxu0 0.0
    %v838 = vand.u32 %v495, 4294901760
    %v839 = vsub.f32 %v495, %v838
    %v840 = vand.u32 %v839, 4294901760
    %841 = vmatpush1.msra.mxu0 %v840
    %842 = vmatprep.subr.mxu0 0.0
    %v843 = vand.u32 %v496, 4294901760
    %v844 = vsub.f32 %v496, %v843
    %v845 = vand.u32 %v844, 4294901760
    %846 = vmatpush1.msra.mxu0 %v845
    %847 = vmatprep.subr.mxu0 0.0
    %v848 = vand.u32 %v497, 4294901760
    %v849 = vsub.f32 %v497, %v848
    %v850 = vand.u32 %v849, 4294901760
    %851 = vmatpush1.msra.mxu0 %v850
    %852 = vmatprep.subr.mxu0 0.0
    %v853 = vand.u32 %v498, 4294901760
    %v854 = vsub.f32 %v498, %v853
    %v855 = vand.u32 %v854, 4294901760
    %856 = vmatpush1.msra.mxu0 %v855
    %857 = vmatprep.subr.mxu0 0.0
    %858 = vmatpush1.msra.mxu0 0.0
    %859 = vmatprep.subr.mxu0 0.0
    %860 = vmatpush1.msra.mxu0 0.0
    %861 = vmatprep.subr.mxu0 0.0
    %862 = vmatpush1.msra.mxu0 0.0
    %863 = vmatprep.subr.mxu0 0.0
    %864 = vmatpush1.msra.mxu0 0.0
    %865 = vmatprep.subr.mxu0 0.0
    %866 = vmatpush1.msra.mxu0 0.0
    %867 = vmatprep.subr.mxu0 0.0
    %868 = vmatpush1.msra.mxu0 0.0
    %869 = vmatprep.subr.mxu0 0.0
    %870 = vmatpush1.msra.mxu0 0.0
    %871 = vmatprep.subr.mxu0 0.0
    %872 = vmatpush1.msra.mxu0 0.0
    %873 = vmatprep.subr.mxu0 0.0
    %874 = vmatpush1.msra.mxu0 0.0
    %875 = vmatprep.subr.mxu0 0.0
    %876 = vmatpush1.msra.mxu0 0.0
    %877 = vmatprep.subr.mxu0 0.0
    %878 = vmatpush1.msra.mxu0 0.0
    %879 = vmatprep.subr.mxu0 0.0
    %880 = vmatpush1.msra.mxu0 0.0
    %881 = vmatprep.subr.mxu0 0.0
    %882 = vmatpush1.msra.mxu0 0.0
    %883 = vmatprep.subr.mxu0 0.0
    %884 = vmatpush1.msra.mxu0 0.0
    %885 = vmatprep.subr.mxu0 0.0
    %886 = vmatpush1.msra.mxu0 0.0
    %887 = vmatprep.subr.mxu0 0.0
    %888 = vmatpush1.msra.mxu0 0.0
    %889 = vmatprep.subr.mxu0 0.0
    %890 = vmatpush1.msra.mxu0 0.0
    %891 = vmatprep.subr.mxu0 0.0
    %892 = vmatpush1.msra.mxu0 0.0
    %893 = vmatprep.subr.mxu0 0.0
    %894 = vmatpush1.msra.mxu0 0.0
    %895 = vmatprep.subr.mxu0 0.0
    %896 = vmatpush1.msra.mxu0 0.0
    %897 = vmatprep.subr.mxu0 0.0
    %898 = vmatpush1.msra.mxu0 0.0
    %899 = vmatprep.subr.mxu0 0.0
    %900 = vmatpush1.msra.mxu0 0.0
    %901 = vmatprep.subr.mxu0 0.0
    %902 = vmatpush1.msra.mxu0 0.0
    %903 = vmatprep.subr.mxu0 0.0
    %904 = vmatpush1.msra.mxu0 0.0
    %905 = vmatprep.subr.mxu0 0.0
    %906 = vmatpush1.msra.mxu0 0.0
    %907 = vmatprep.subr.mxu0 0.0
    %908 = vmatpush1.msra.mxu0 0.0
    %909 = vmatprep.subr.mxu0 0.0
    %910 = vmatpush1.msra.mxu0 0.0
    %911 = vmatprep.subr.mxu0 0.0
    %912 = vmatpush1.msra.mxu0 0.0
    %913 = vmatprep.mubr.f32.mxu0 0.0
    %v914 = vand.u32 %v508, 4294901760
    %915 = vmatmul.mubr.f32.gmra.mrb[0].mxu0 %v914
    %v916 = vpop.f32.mrb[0].mxu0
    %v917 = vadd.f32 %v834, %v916
    %v918 = vpop.f32.mrb[0].mxu0
    %919 = vdwg.mxu0
    %920 = vmatprep.subr.mxu0 0.0
    %v921 = vand.u32 %v495, 4294901760
    %922 = vmatpush1.msra.mxu0 %v921
    %923 = vmatprep.subr.mxu0 0.0
    %v924 = vand.u32 %v496, 4294901760
    %925 = vmatpush1.msra.mxu0 %v924
    %926 = vmatprep.subr.mxu0 0.0
    %v927 = vand.u32 %v497, 4294901760
    %928 = vmatpush1.msra.mxu0 %v927
    %929 = vmatprep.subr.mxu0 0.0
    %v930 = vand.u32 %v498, 4294901760
    %931 = vmatpush1.msra.mxu0 %v930
    %932 = vmatprep.subr.mxu0 0.0
    %933 = vmatpush1.msra.mxu0 0.0
    %934 = vmatprep.subr.mxu0 0.0
    %935 = vmatpush1.msra.mxu0 0.0
    %936 = vmatprep.subr.mxu0 0.0
    %937 = vmatpush1.msra.mxu0 0.0
    %938 = vmatprep.subr.mxu0 0.0
    %939 = vmatpush1.msra.mxu0 0.0
    %940 = vmatprep.subr.mxu0 0.0
    %941 = vmatpush1.msra.mxu0 0.0
    %942 = vmatprep.subr.mxu0 0.0
    %943 = vmatpush1.msra.mxu0 0.0
    %944 = vmatprep.subr.mxu0 0.0
    %945 = vmatpush1.msra.mxu0 0.0
    %946 = vmatprep.subr.mxu0 0.0
    %947 = vmatpush1.msra.mxu0 0.0
    %948 = vmatprep.subr.mxu0 0.0
    %949 = vmatpush1.msra.mxu0 0.0
    %950 = vmatprep.subr.mxu0 0.0
    %951 = vmatpush1.msra.mxu0 0.0
    %952 = vmatprep.subr.mxu0 0.0
    %953 = vmatpush1.msra.mxu0 0.0
    %954 = vmatprep.subr.mxu0 0.0
    %955 = vmatpush1.msra.mxu0 0.0
    %956 = vmatprep.subr.mxu0 0.0
    %957 = vmatpush1.msra.mxu0 0.0
    %958 = vmatprep.subr.mxu0 0.0
    %959 = vmatpush1.msra.mxu0 0.0
    %960 = vmatprep.subr.mxu0 0.0
    %961 = vmatpush1.msra.mxu0 0.0
    %962 = vmatprep.subr.mxu0 0.0
    %963 = vmatpush1.msra.mxu0 0.0
    %964 = vmatprep.subr.mxu0 0.0
    %965 = vmatpush1.msra.mxu0 0.0
    %966 = vmatprep.subr.mxu0 0.0
    %967 = vmatpush1.msra.mxu0 0.0
    %968 = vmatprep.subr.mxu0 0.0
    %969 = vmatpush1.msra.mxu0 0.0
    %970 = vmatprep.subr.mxu0 0.0
    %971 = vmatpush1.msra.mxu0 0.0
    %972 = vmatprep.subr.mxu0 0.0
    %973 = vmatpush1.msra.mxu0 0.0
    %974 = vmatprep.subr.mxu0 0.0
    %975 = vmatpush1.msra.mxu0 0.0
    %976 = vmatprep.subr.mxu0 0.0
    %977 = vmatpush1.msra.mxu0 0.0
    %978 = vmatprep.subr.mxu0 0.0
    %979 = vmatpush1.msra.mxu0 0.0
    %980 = vmatprep.subr.mxu0 0.0
    %981 = vmatpush1.msra.mxu0 0.0
    %982 = vmatprep.subr.mxu0 0.0
    %983 = vmatpush1.msra.mxu0 0.0
    %984 = vmatprep.subr.mxu0 0.0
    %985 = vmatpush1.msra.mxu0 0.0
    %986 = vmatprep.subr.mxu0 0.0
    %987 = vmatpush1.msra.mxu0 0.0
    %988 = vmatprep.mubr.f32.mxu0 0.0
    %v989 = vand.u32 %v508, 4294901760
    %990 = vmatmul.mubr.f32.gmra.mrb[0].mxu0 %v989
    %v991 = vpop.f32.mrb[0].mxu0
    %v992 = vadd.f32 %v917, %v991
    %v993 = vpop.f32.mrb[0].mxu0
    %994 = vdwg.mxu0
    %vm995 = vcmask 64512
    %996 = vst.msk [vmem:[#allocation2] sm:$0xff] %vm995, %v992
    // Predicated region
    $region22: #{policy_forward.1} parent=1 // pred_check
      _
    $region23: #{policy_forward.1} parent=1 // pred_check_branch
      %998 = sbr.rel (0) target = $region25
    $region24: #{policy_forward.1} parent=1 // pred_region
      %s1000 = ssub.s32 128, 32
      %1001 = vsyncadd [#allocation3], %s1000
      %s1002 = sshll.u32 [#allocation2], 4
      %s1003 = int_to_ptr.vmem [resolvable:$true] %s1002
      %1008 = dma.vmem_to_hbm [thread:$0]  %s1003, 32, %s5, [#allocation3], 32, 32, 2
    $region25: #{policy_forward.1} parent=1 // pred_fallthru
      _
    // Predicated region
    $region26: #{policy_forward.1} parent=1 // pred_check
      _
    $region27: #{policy_forward.1} parent=1 // pred_check_branch
      %1010 = sbr.rel (0) target = $region29
    $region28: #{policy_forward.1} parent=1 // pred_region
      %1011 = dma.done [#allocation3], 128
    $region29: #{policy_forward.1} parent=1 // pred_fallthru
      _
    %1012 = vsyncpa [#allocation3], 1

</llo_original>
